<compile_context>
chip_gen: v5e
topology: v5e:2x2
jax: 0.10.0
libtpu: 0.0.40
codegen_flags: <defaults>
</compile_context>

<pallas_src>
import jax
import jax.numpy as jnp
from jax.experimental import pallas as pl
from jax.experimental.pallas import tpu as pltpu

# ----------------------------- config ---------------------------------------
BATCH = 2
SEQ = 8
VOCAB = 32
BERT_HIDDEN = 32          # surrogate for bert.config.hidden_size
RESNET_FEAT = 64          # surrogate for resnet50.fc.in_features (2048)
MIDDLE_HIDDEN = 32        # config.middle_hidden_size
OUT_HIDDEN = 32           # config.out_hidden_size
NUM_LABELS = 4            # config.num_labels
IMG_C, IMG_H, IMG_W = 3, 16, 16
HW = IMG_H * IMG_W

BPAD = 8                  # batch rows padded to a full sublane tile (in-kernel, free)
LANES = 128               # every activation / weight block is 128 lanes wide

# packed parameter slab: one f32 [P_ROWS, 128] array (single DMA).
#   rows   0:128  WA = blockdiag(wp[32,32] -> cols 0:32, wr[3,64] -> cols 32:96)
#   rows 128:256  WB = blockdiag(wt[32,32] -> cols 0:32, wi[64,32] -> cols 32:64)
#   rows 256:384  W1 [64,32] -> cols 0:32
#   rows 384:512  W2 [32, 4] -> cols 0:4
#   row  512      bA = [bp(32) | br(64) | 0]
#   row  520      bB = [bt(32) | bi(32) | 0]
#   row  528      b1 [32]
#   row  536      b2 [4]
ROW_WA, ROW_WB, ROW_W1, ROW_W2 = 0, 128, 256, 384
ROW_BA, ROW_BB, ROW_B1, ROW_B2 = 512, 520, 528, 536
P_ROWS = 544


# ----------------------------- Pallas kernel --------------------------------
def fused_model_kernel(tok_ref, mask_ref, lbl_ref, embed_ref, imgs_ref, p_ref, out_ref):
    B, S = tok_ref.shape
    rows = jax.lax.broadcasted_iota(jnp.int32, (BPAD, LANES), 0)
    cols = jax.lax.broadcasted_iota(jnp.int32, (BPAD, LANES), 1)

    # ---- build x0 = [text_pooled(32) | img_channel_means(3) | 0] as one (8,128) tile
    # (gather via dynamic row loads from the embed table; Dropout -> identity)
    x0 = jnp.zeros((BPAD, LANES), jnp.float32)
    for b in range(B):
        acc = jnp.zeros((1, LANES), jnp.float32)
        cnt = jnp.float32(0.0)
        for s in range(S):
            tok = tok_ref[b, s]                               # SMEM scalar
            m = mask_ref[b, s].astype(jnp.float32)            # SMEM scalar
            acc = acc + m * embed_ref[pl.ds(tok, 1), :]       # dynamic row gather
            cnt = cnt + m
        trow = acc / jnp.maximum(cnt, 1.0)                    # masked mean (1,128)
        x0 = jnp.where(rows == b, trow, x0)
        for c in range(IMG_C):                                # image global avg pool
            mean_c = jnp.sum(imgs_ref[b:b + 1, c * HW:(c + 1) * HW]) * (1.0 / HW)
            x0 = jnp.where((rows == b) & (cols == BERT_HIDDEN + c), mean_c, x0)

    # Stage A: block-diag(bert pooler dense | resnet surrogate dense) -> (8,128)
    wa = p_ref[ROW_WA:ROW_WA + LANES, :]
    ba = p_ref[ROW_BA:ROW_BA + 1, :]
    a = jnp.dot(x0, wa, preferred_element_type=jnp.float32) + ba
    # tanh on pooler columns (EUP), ReLU elsewhere (VPU); padded columns stay 0
    a = jnp.where(cols < BERT_HIDDEN, jnp.tanh(a), jnp.maximum(a, 0.0))

    # Stage B: block-diag(text trans | image trans). Output columns 0:64 are
    # exactly torch.cat([text_feature, img_feature], dim=1) -> no lane concat.
    wb = p_ref[ROW_WB:ROW_WB + LANES, :]
    bb = p_ref[ROW_BB:ROW_BB + 1, :]
    fused = jnp.maximum(jnp.dot(a, wb, preferred_element_type=jnp.float32) + bb, 0.0)

    # classifier: Linear -> ReLU -> Linear
    w1 = p_ref[ROW_W1:ROW_W1 + LANES, :]
    b1 = p_ref[ROW_B1:ROW_B1 + 1, :]
    h = jnp.maximum(jnp.dot(fused, w1, preferred_element_type=jnp.float32) + b1, 0.0)

    w2 = p_ref[ROW_W2:ROW_W2 + LANES, :]
    b2 = p_ref[ROW_B2:ROW_B2 + 1, :]
    logits = jnp.dot(h, w2, preferred_element_type=jnp.float32) + b2   # cols 0:4 real

    # mask padded label columns for argmax / softmax
    NEG = jnp.float32(-1e30)
    logits_m = jnp.where(cols < NUM_LABELS, logits, NEG)
    max_l = jnp.max(logits_m, axis=1, keepdims=True)                   # (8,1)

    # pred = argmax(logits, dim=1)  (lowest index among ties, torch semantics)
    pred = jnp.min(jnp.where(logits_m == max_l, cols, LANES), axis=1, keepdims=True)

    # CrossEntropyLoss(logits, labels), mean over the B real rows.
    shifted = logits_m - max_l
    lse = jnp.log(jnp.sum(jnp.exp(shifted), axis=1, keepdims=True)) + max_l
    lbl_full = jnp.zeros((BPAD, LANES), jnp.int32)
    for b in range(B):
        lbl_full = jnp.where(rows == b, lbl_ref[b], lbl_full)          # SMEM scalar
    picked = jnp.sum(jnp.where(cols == lbl_full, logits, 0.0), axis=1, keepdims=True)
    per_row = lse - picked                                             # (8,1)
    valid = rows[:, 0:1] < B
    loss = jnp.sum(jnp.where(valid, per_row, 0.0)) * (1.0 / B)

    # single lane-dense (8,128) output: column 0 = pred (f32), rest = loss
    out_ref[...] = jnp.where(cols == 0, pred.astype(jnp.float32), loss)


def fused_head(texts, texts_mask, imgs_flat, labels, embed_pad, pslab):
    """Whole forward (pooling + trans + concat + classifier + argmax + CE loss)
    in one grid-less Pallas call with a single (8,128) output slab."""
    B = texts.shape[0]
    out = pl.pallas_call(
        fused_model_kernel,
        out_shape=jax.ShapeDtypeStruct((BPAD, LANES), jnp.float32),
        in_specs=[
            pl.BlockSpec(memory_space=pltpu.MemorySpace.SMEM),   # token ids
            pl.BlockSpec(memory_space=pltpu.MemorySpace.SMEM),   # mask
            pl.BlockSpec(memory_space=pltpu.MemorySpace.SMEM),   # labels
            pl.BlockSpec(memory_space=pltpu.MemorySpace.VMEM),   # embed table (padded)
            pl.BlockSpec(memory_space=pltpu.MemorySpace.VMEM),   # imgs (B, C*H*W)
            pl.BlockSpec(memory_space=pltpu.MemorySpace.VMEM),   # packed params
        ],
        out_specs=pl.BlockSpec(memory_space=pltpu.MemorySpace.VMEM),
    )(texts, texts_mask, labels, embed_pad, imgs_flat, pslab)
    pred = out[:B, 0].astype(jnp.int32)
    loss = out[0, 1]
    return pred, loss


# ----------------------------- parameters ------------------------------------
def init_raw_params(key):
    ks = jax.random.split(key, 12)
    s = 0.05
    return {
        # surrogate backbones
        "embed": jax.random.normal(ks[0], (VOCAB, BERT_HIDDEN), jnp.float32) * s,
        "wp": jax.random.normal(ks[1], (BERT_HIDDEN, BERT_HIDDEN), jnp.float32) * s,
        "bp": jnp.zeros((BERT_HIDDEN,), jnp.float32),
        "wr": jax.random.normal(ks[2], (IMG_C, RESNET_FEAT), jnp.float32) * s,
        "br": jnp.zeros((RESNET_FEAT,), jnp.float32),
        # text trans (pre-transposed [in, out])
        "wt": jax.random.normal(ks[3], (BERT_HIDDEN, MIDDLE_HIDDEN), jnp.float32) * s,
        "bt": jax.random.normal(ks[4], (1, MIDDLE_HIDDEN), jnp.float32) * s,
        # image trans
        "wi": jax.random.normal(ks[5], (RESNET_FEAT, MIDDLE_HIDDEN), jnp.float32) * s,
        "bi": jax.random.normal(ks[6], (1, MIDDLE_HIDDEN), jnp.float32) * s,
        # classifier
        "w1": jax.random.normal(ks[7], (2 * MIDDLE_HIDDEN, OUT_HIDDEN), jnp.float32) * s,
        "b1": jax.random.normal(ks[8], (1, OUT_HIDDEN), jnp.float32) * s,
        "w2": jax.random.normal(ks[9], (OUT_HIDDEN, NUM_LABELS), jnp.float32) * s,
        "b2": jax.random.normal(ks[10], (1, NUM_LABELS), jnp.float32) * s,
    }


def pack_params(raw):
    """Pack all dense weights + biases into one [544, 128] f32 slab (single DMA,
    full-128-lane loads everywhere)."""
    P = jnp.zeros((P_ROWS, LANES), jnp.float32)
    P = P.at[ROW_WA:ROW_WA + BERT_HIDDEN, 0:BERT_HIDDEN].set(raw["wp"])
    P = P.at[ROW_WA + BERT_HIDDEN:ROW_WA + BERT_HIDDEN + IMG_C,
             BERT_HIDDEN:BERT_HIDDEN + RESNET_FEAT].set(raw["wr"])
    P = P.at[ROW_WB:ROW_WB + BERT_HIDDEN, 0:MIDDLE_HIDDEN].set(raw["wt"])
    P = P.at[ROW_WB + BERT_HIDDEN:ROW_WB + BERT_HIDDEN + RESNET_FEAT,
             MIDDLE_HIDDEN:2 * MIDDLE_HIDDEN].set(raw["wi"])
    P = P.at[ROW_W1:ROW_W1 + 2 * MIDDLE_HIDDEN, 0:OUT_HIDDEN].set(raw["w1"])
    P = P.at[ROW_W2:ROW_W2 + OUT_HIDDEN, 0:NUM_LABELS].set(raw["w2"])
    P = P.at[ROW_BA, 0:BERT_HIDDEN].set(raw["bp"])
    P = P.at[ROW_BA, BERT_HIDDEN:BERT_HIDDEN + RESNET_FEAT].set(raw["br"])
    P = P.at[ROW_BB, 0:MIDDLE_HIDDEN].set(raw["bt"][0])
    P = P.at[ROW_BB, MIDDLE_HIDDEN:2 * MIDDLE_HIDDEN].set(raw["bi"][0])
    P = P.at[ROW_B1, 0:OUT_HIDDEN].set(raw["b1"][0])
    P = P.at[ROW_B2, 0:NUM_LABELS].set(raw["b2"][0])
    return P


def pack_embed(raw):
    """Embedding table padded to 128 lanes so in-kernel gathered rows are full vregs."""
    return jnp.zeros((VOCAB, LANES), jnp.float32).at[:, :BERT_HIDDEN].set(raw["embed"])


# ----------------------------- forward ---------------------------------------
def model_forward(texts, texts_mask, imgs, labels, params):
    # TODO(synk): pretrained BERT backbone has no synthetic-kernel equivalent;
    # surrogate = embedding lookup + masked mean pool + pooler dense/tanh,
    # all executed inside the Pallas kernel.
    # TODO(synk): pretrained ResNet50 backbone has no synthetic-kernel equivalent;
    # surrogate = global average pool + dense/ReLU, also inside the kernel.
    B = texts.shape[0]
    imgs_flat = imgs.reshape(B, IMG_C * IMG_H * IMG_W)   # free bitcast reshape
    return fused_head(texts, texts_mask, imgs_flat, labels.astype(jnp.int32),
                      params["embed_pad"], params["pslab"])


# Pure-JAX reference (mirrors the original un-fused computation) for validation.
def reference_forward(texts, texts_mask, imgs, labels, raw):
    emb = raw["embed"][texts]
    m = texts_mask.astype(jnp.float32)[..., None]
    pooled = jnp.sum(emb * m, axis=1) / jnp.maximum(jnp.sum(m, axis=1), 1.0)
    text_feat = jnp.tanh(pooled @ raw["wp"] + raw["bp"])
    img_pooled = jnp.mean(imgs, axis=(2, 3))
    img_feat = jnp.maximum(img_pooled @ raw["wr"] + raw["br"], 0.0)
    t = jnp.maximum(text_feat @ raw["wt"] + raw["bt"], 0.0)
    i = jnp.maximum(img_feat @ raw["wi"] + raw["bi"], 0.0)
    fused = jnp.concatenate([t, i], axis=1)
    h = jnp.maximum(fused @ raw["w1"] + raw["b1"], 0.0)
    logits = h @ raw["w2"] + raw["b2"]
    pred = jnp.argmax(logits, axis=1)
    logp = jax.nn.log_softmax(logits, axis=1)
    loss = -jnp.mean(jnp.take_along_axis(logp, labels[:, None], axis=1))
    return pred.astype(jnp.int32), loss


# ----------------------------- main ------------------------------------------
if __name__ == "__main__":
    key = jax.random.PRNGKey(0)
    k_param, k_txt, k_img, k_lbl = jax.random.split(key, 4)

    raw = init_raw_params(k_param)
    params = {"embed_pad": pack_embed(raw), "pslab": pack_params(raw)}

    texts = jax.random.randint(k_txt, (BATCH, SEQ), 0, VOCAB, dtype=jnp.int32)
    texts_mask = jnp.ones((BATCH, SEQ), dtype=jnp.int32)
    imgs = jax.random.normal(k_img, (BATCH, IMG_C, IMG_H, IMG_W), jnp.float32)
    labels = jax.random.randint(k_lbl, (BATCH,), 0, NUM_LABELS, dtype=jnp.int32)

    pred_labels, loss = jax.jit(model_forward)(texts, texts_mask, imgs, labels, params)
    jax.block_until_ready((pred_labels, loss))

    ref_pred, ref_loss = jax.jit(reference_forward)(texts, texts_mask, imgs, labels, raw)
    jax.block_until_ready((ref_pred, ref_loss))

    assert pred_labels.shape == (BATCH,)
    assert loss.shape == ()
    assert bool(jnp.all(pred_labels == ref_pred)), (pred_labels, ref_pred)
    assert bool(jnp.allclose(loss, ref_loss, atol=1e-3, rtol=1e-3)), (loss, ref_loss)
    print("KERNEL_OK")
</pallas_src>

<mosaic_0001>
module attributes {stable_mosaic.version = 11 : i64} {
  func.func @fused_model_kernel(%arg0: memref<2x8xi32, #tpu.memory_space<smem>>, %arg1: memref<2x8xi32, #tpu.memory_space<smem>>, %arg2: memref<2xi32, #tpu.memory_space<smem>>, %arg3: memref<32x128xf32, #tpu.memory_space<vmem>>, %arg4: memref<2x768xf32, #tpu.memory_space<vmem>>, %arg5: memref<544x128xf32, #tpu.memory_space<vmem>>, %arg6: memref<8x128xf32, #tpu.memory_space<vmem>>) attributes {dimension_semantics = [], scalar_prefetch = 0 : i64, scratch_operands = 0 : i64, tpu.core_type = #tpu.core_type<tc>} {
    %0 = tpu.iota {dimensions = array<i32: 0>} : vector<8x128xi32>
    %1 = tpu.iota {dimensions = array<i32: 1>} : vector<8x128xi32>
    %cst = arith.constant 0.000000e+00 : f32
    %2 = vector.broadcast %cst : f32 to vector<8x128xf32>
    %cst_0 = arith.constant 0.000000e+00 : f32
    %3 = vector.broadcast %cst_0 : f32 to vector<1x128xf32>
    %c0 = arith.constant 0 : index
    %c0_1 = arith.constant 0 : index
    %4 = memref.load %arg0[%c0, %c0_1] : memref<2x8xi32, #tpu.memory_space<smem>>
    %c0_2 = arith.constant 0 : index
    %c0_3 = arith.constant 0 : index
    %5 = memref.load %arg1[%c0_2, %c0_3] : memref<2x8xi32, #tpu.memory_space<smem>>
    %6 = arith.sitofp %5 : i32 to f32
    %7 = arith.index_cast %4 : i32 to index
    %c0_4 = arith.constant 0 : index
    %8 = vector.load %arg3[%7, %c0_4] : memref<32x128xf32, #tpu.memory_space<vmem>>, vector<1x128xf32>
    %9 = vector.broadcast %6 : f32 to vector<1x128xf32>
    %10 = arith.mulf %9, %8 : vector<1x128xf32>
    %11 = arith.addf %3, %10 : vector<1x128xf32>
    %cst_5 = arith.constant 0.000000e+00 : f32
    %12 = arith.addf %cst_5, %6 : f32
    %c0_6 = arith.constant 0 : index
    %c1 = arith.constant 1 : index
    %13 = memref.load %arg0[%c0_6, %c1] : memref<2x8xi32, #tpu.memory_space<smem>>
    %c0_7 = arith.constant 0 : index
    %c1_8 = arith.constant 1 : index
    %14 = memref.load %arg1[%c0_7, %c1_8] : memref<2x8xi32, #tpu.memory_space<smem>>
    %15 = arith.sitofp %14 : i32 to f32
    %16 = arith.index_cast %13 : i32 to index
    %c0_9 = arith.constant 0 : index
    %17 = vector.load %arg3[%16, %c0_9] : memref<32x128xf32, #tpu.memory_space<vmem>>, vector<1x128xf32>
    %18 = vector.broadcast %15 : f32 to vector<1x128xf32>
    %19 = arith.mulf %18, %17 : vector<1x128xf32>
    %20 = arith.addf %11, %19 : vector<1x128xf32>
    %21 = arith.addf %12, %15 : f32
    %c0_10 = arith.constant 0 : index
    %c2 = arith.constant 2 : index
    %22 = memref.load %arg0[%c0_10, %c2] : memref<2x8xi32, #tpu.memory_space<smem>>
    %c0_11 = arith.constant 0 : index
    %c2_12 = arith.constant 2 : index
    %23 = memref.load %arg1[%c0_11, %c2_12] : memref<2x8xi32, #tpu.memory_space<smem>>
    %24 = arith.sitofp %23 : i32 to f32
    %25 = arith.index_cast %22 : i32 to index
    %c0_13 = arith.constant 0 : index
    %26 = vector.load %arg3[%25, %c0_13] : memref<32x128xf32, #tpu.memory_space<vmem>>, vector<1x128xf32>
    %27 = vector.broadcast %24 : f32 to vector<1x128xf32>
    %28 = arith.mulf %27, %26 : vector<1x128xf32>
    %29 = arith.addf %20, %28 : vector<1x128xf32>
    %30 = arith.addf %21, %24 : f32
    %c0_14 = arith.constant 0 : index
    %c3 = arith.constant 3 : index
    %31 = memref.load %arg0[%c0_14, %c3] : memref<2x8xi32, #tpu.memory_space<smem>>
    %c0_15 = arith.constant 0 : index
    %c3_16 = arith.constant 3 : index
    %32 = memref.load %arg1[%c0_15, %c3_16] : memref<2x8xi32, #tpu.memory_space<smem>>
    %33 = arith.sitofp %32 : i32 to f32
    %34 = arith.index_cast %31 : i32 to index
    %c0_17 = arith.constant 0 : index
    %35 = vector.load %arg3[%34, %c0_17] : memref<32x128xf32, #tpu.memory_space<vmem>>, vector<1x128xf32>
    %36 = vector.broadcast %33 : f32 to vector<1x128xf32>
    %37 = arith.mulf %36, %35 : vector<1x128xf32>
    %38 = arith.addf %29, %37 : vector<1x128xf32>
    %39 = arith.addf %30, %33 : f32
    %c0_18 = arith.constant 0 : index
    %c4 = arith.constant 4 : index
    %40 = memref.load %arg0[%c0_18, %c4] : memref<2x8xi32, #tpu.memory_space<smem>>
    %c0_19 = arith.constant 0 : index
    %c4_20 = arith.constant 4 : index
    %41 = memref.load %arg1[%c0_19, %c4_20] : memref<2x8xi32, #tpu.memory_space<smem>>
    %42 = arith.sitofp %41 : i32 to f32
    %43 = arith.index_cast %40 : i32 to index
    %c0_21 = arith.constant 0 : index
    %44 = vector.load %arg3[%43, %c0_21] : memref<32x128xf32, #tpu.memory_space<vmem>>, vector<1x128xf32>
    %45 = vector.broadcast %42 : f32 to vector<1x128xf32>
    %46 = arith.mulf %45, %44 : vector<1x128xf32>
    %47 = arith.addf %38, %46 : vector<1x128xf32>
    %48 = arith.addf %39, %42 : f32
    %c0_22 = arith.constant 0 : index
    %c5 = arith.constant 5 : index
    %49 = memref.load %arg0[%c0_22, %c5] : memref<2x8xi32, #tpu.memory_space<smem>>
    %c0_23 = arith.constant 0 : index
    %c5_24 = arith.constant 5 : index
    %50 = memref.load %arg1[%c0_23, %c5_24] : memref<2x8xi32, #tpu.memory_space<smem>>
    %51 = arith.sitofp %50 : i32 to f32
    %52 = arith.index_cast %49 : i32 to index
    %c0_25 = arith.constant 0 : index
    %53 = vector.load %arg3[%52, %c0_25] : memref<32x128xf32, #tpu.memory_space<vmem>>, vector<1x128xf32>
    %54 = vector.broadcast %51 : f32 to vector<1x128xf32>
    %55 = arith.mulf %54, %53 : vector<1x128xf32>
    %56 = arith.addf %47, %55 : vector<1x128xf32>
    %57 = arith.addf %48, %51 : f32
    %c0_26 = arith.constant 0 : index
    %c6 = arith.constant 6 : index
    %58 = memref.load %arg0[%c0_26, %c6] : memref<2x8xi32, #tpu.memory_space<smem>>
    %c0_27 = arith.constant 0 : index
    %c6_28 = arith.constant 6 : index
    %59 = memref.load %arg1[%c0_27, %c6_28] : memref<2x8xi32, #tpu.memory_space<smem>>
    %60 = arith.sitofp %59 : i32 to f32
    %61 = arith.index_cast %58 : i32 to index
    %c0_29 = arith.constant 0 : index
    %62 = vector.load %arg3[%61, %c0_29] : memref<32x128xf32, #tpu.memory_space<vmem>>, vector<1x128xf32>
    %63 = vector.broadcast %60 : f32 to vector<1x128xf32>
    %64 = arith.mulf %63, %62 : vector<1x128xf32>
    %65 = arith.addf %56, %64 : vector<1x128xf32>
    %66 = arith.addf %57, %60 : f32
    %c0_30 = arith.constant 0 : index
    %c7 = arith.constant 7 : index
    %67 = memref.load %arg0[%c0_30, %c7] : memref<2x8xi32, #tpu.memory_space<smem>>
    %c0_31 = arith.constant 0 : index
    %c7_32 = arith.constant 7 : index
    %68 = memref.load %arg1[%c0_31, %c7_32] : memref<2x8xi32, #tpu.memory_space<smem>>
    %69 = arith.sitofp %68 : i32 to f32
    %70 = arith.index_cast %67 : i32 to index
    %c0_33 = arith.constant 0 : index
    %71 = vector.load %arg3[%70, %c0_33] : memref<32x128xf32, #tpu.memory_space<vmem>>, vector<1x128xf32>
    %72 = vector.broadcast %69 : f32 to vector<1x128xf32>
    %73 = arith.mulf %72, %71 : vector<1x128xf32>
    %74 = arith.addf %65, %73 : vector<1x128xf32>
    %75 = arith.addf %66, %69 : f32
    %cst_34 = arith.constant 1.000000e+00 : f32
    %76 = arith.maximumf %75, %cst_34 : f32
    %77 = vector.broadcast %76 : f32 to vector<1x128xf32>
    %78 = arith.divf %74, %77 : vector<1x128xf32>
    %c0_i32 = arith.constant 0 : i32
    %79 = vector.broadcast %c0_i32 : i32 to vector<8x128xi32>
    %80 = arith.cmpi eq, %0, %79 : vector<8x128xi32>
    %81 = vector.shape_cast %78 : vector<1x128xf32> to vector<1x128xf32>
    %82 = vector.broadcast %81 : vector<1x128xf32> to vector<8x128xf32>
    %83 = arith.select %80, %82, %2 : vector<8x128xi1>, vector<8x128xf32>
    %c0_35 = arith.constant 0 : index
    %c0_36 = arith.constant 0 : index
    %84 = vector.load %arg4[%c0_35, %c0_36] : memref<2x768xf32, #tpu.memory_space<vmem>>, vector<1x256xf32>
    %85 = vector.shape_cast %84 : vector<1x256xf32> to vector<1x1x256xf32>
    %cst_37 = arith.constant dense<0.000000e+00> : vector<1xf32>
    %86 = vector.multi_reduction <add>, %85, %cst_37 [1, 2] : vector<1x1x256xf32> to vector<1xf32>
    %87 = vector.shape_cast %86 : vector<1xf32> to vector<1x1x1xf32>
    %88 = vector.extract %87[0, 0, 0] : f32 from vector<1x1x1xf32>
    %cst_38 = arith.constant 3.906250e-03 : f32
    %89 = arith.mulf %88, %cst_38 : f32
    %c0_i32_39 = arith.constant 0 : i32
    %90 = vector.broadcast %c0_i32_39 : i32 to vector<8x128xi32>
    %91 = arith.cmpi eq, %0, %90 : vector<8x128xi32>
    %c32_i32 = arith.constant 32 : i32
    %92 = vector.broadcast %c32_i32 : i32 to vector<8x128xi32>
    %93 = arith.cmpi eq, %1, %92 : vector<8x128xi32>
    %94 = arith.andi %91, %93 : vector<8x128xi1>
    %95 = vector.broadcast %89 : f32 to vector<8x128xf32>
    %96 = arith.select %94, %95, %83 : vector<8x128xi1>, vector<8x128xf32>
    %c0_40 = arith.constant 0 : index
    %c256 = arith.constant 256 : index
    %97 = vector.load %arg4[%c0_40, %c256] : memref<2x768xf32, #tpu.memory_space<vmem>>, vector<1x256xf32>
    %98 = vector.shape_cast %97 : vector<1x256xf32> to vector<1x1x256xf32>
    %cst_41 = arith.constant dense<0.000000e+00> : vector<1xf32>
    %99 = vector.multi_reduction <add>, %98, %cst_41 [1, 2] : vector<1x1x256xf32> to vector<1xf32>
    %100 = vector.shape_cast %99 : vector<1xf32> to vector<1x1x1xf32>
    %101 = vector.extract %100[0, 0, 0] : f32 from vector<1x1x1xf32>
    %cst_42 = arith.constant 3.906250e-03 : f32
    %102 = arith.mulf %101, %cst_42 : f32
    %c0_i32_43 = arith.constant 0 : i32
    %103 = vector.broadcast %c0_i32_43 : i32 to vector<8x128xi32>
    %104 = arith.cmpi eq, %0, %103 : vector<8x128xi32>
    %c33_i32 = arith.constant 33 : i32
    %105 = vector.broadcast %c33_i32 : i32 to vector<8x128xi32>
    %106 = arith.cmpi eq, %1, %105 : vector<8x128xi32>
    %107 = arith.andi %104, %106 : vector<8x128xi1>
    %108 = vector.broadcast %102 : f32 to vector<8x128xf32>
    %109 = arith.select %107, %108, %96 : vector<8x128xi1>, vector<8x128xf32>
    %c0_44 = arith.constant 0 : index
    %c512 = arith.constant 512 : index
    %110 = vector.load %arg4[%c0_44, %c512] : memref<2x768xf32, #tpu.memory_space<vmem>>, vector<1x256xf32>
    %111 = vector.shape_cast %110 : vector<1x256xf32> to vector<1x1x256xf32>
    %cst_45 = arith.constant dense<0.000000e+00> : vector<1xf32>
    %112 = vector.multi_reduction <add>, %111, %cst_45 [1, 2] : vector<1x1x256xf32> to vector<1xf32>
    %113 = vector.shape_cast %112 : vector<1xf32> to vector<1x1x1xf32>
    %114 = vector.extract %113[0, 0, 0] : f32 from vector<1x1x1xf32>
    %cst_46 = arith.constant 3.906250e-03 : f32
    %115 = arith.mulf %114, %cst_46 : f32
    %c0_i32_47 = arith.constant 0 : i32
    %116 = vector.broadcast %c0_i32_47 : i32 to vector<8x128xi32>
    %117 = arith.cmpi eq, %0, %116 : vector<8x128xi32>
    %c34_i32 = arith.constant 34 : i32
    %118 = vector.broadcast %c34_i32 : i32 to vector<8x128xi32>
    %119 = arith.cmpi eq, %1, %118 : vector<8x128xi32>
    %120 = arith.andi %117, %119 : vector<8x128xi1>
    %121 = vector.broadcast %115 : f32 to vector<8x128xf32>
    %122 = arith.select %120, %121, %109 : vector<8x128xi1>, vector<8x128xf32>
    %cst_48 = arith.constant 0.000000e+00 : f32
    %123 = vector.broadcast %cst_48 : f32 to vector<1x128xf32>
    %c1_49 = arith.constant 1 : index
    %c0_50 = arith.constant 0 : index
    %124 = memref.load %arg0[%c1_49, %c0_50] : memref<2x8xi32, #tpu.memory_space<smem>>
    %c1_51 = arith.constant 1 : index
    %c0_52 = arith.constant 0 : index
    %125 = memref.load %arg1[%c1_51, %c0_52] : memref<2x8xi32, #tpu.memory_space<smem>>
    %126 = arith.sitofp %125 : i32 to f32
    %127 = arith.index_cast %124 : i32 to index
    %c0_53 = arith.constant 0 : index
    %128 = vector.load %arg3[%127, %c0_53] : memref<32x128xf32, #tpu.memory_space<vmem>>, vector<1x128xf32>
    %129 = vector.broadcast %126 : f32 to vector<1x128xf32>
    %130 = arith.mulf %129, %128 : vector<1x128xf32>
    %131 = arith.addf %123, %130 : vector<1x128xf32>
    %cst_54 = arith.constant 0.000000e+00 : f32
    %132 = arith.addf %cst_54, %126 : f32
    %c1_55 = arith.constant 1 : index
    %c1_56 = arith.constant 1 : index
    %133 = memref.load %arg0[%c1_55, %c1_56] : memref<2x8xi32, #tpu.memory_space<smem>>
    %c1_57 = arith.constant 1 : index
    %c1_58 = arith.constant 1 : index
    %134 = memref.load %arg1[%c1_57, %c1_58] : memref<2x8xi32, #tpu.memory_space<smem>>
    %135 = arith.sitofp %134 : i32 to f32
    %136 = arith.index_cast %133 : i32 to index
    %c0_59 = arith.constant 0 : index
    %137 = vector.load %arg3[%136, %c0_59] : memref<32x128xf32, #tpu.memory_space<vmem>>, vector<1x128xf32>
    %138 = vector.broadcast %135 : f32 to vector<1x128xf32>
    %139 = arith.mulf %138, %137 : vector<1x128xf32>
    %140 = arith.addf %131, %139 : vector<1x128xf32>
    %141 = arith.addf %132, %135 : f32
    %c1_60 = arith.constant 1 : index
    %c2_61 = arith.constant 2 : index
    %142 = memref.load %arg0[%c1_60, %c2_61] : memref<2x8xi32, #tpu.memory_space<smem>>
    %c1_62 = arith.constant 1 : index
    %c2_63 = arith.constant 2 : index
    %143 = memref.load %arg1[%c1_62, %c2_63] : memref<2x8xi32, #tpu.memory_space<smem>>
    %144 = arith.sitofp %143 : i32 to f32
    %145 = arith.index_cast %142 : i32 to index
    %c0_64 = arith.constant 0 : index
    %146 = vector.load %arg3[%145, %c0_64] : memref<32x128xf32, #tpu.memory_space<vmem>>, vector<1x128xf32>
    %147 = vector.broadcast %144 : f32 to vector<1x128xf32>
    %148 = arith.mulf %147, %146 : vector<1x128xf32>
    %149 = arith.addf %140, %148 : vector<1x128xf32>
    %150 = arith.addf %141, %144 : f32
    %c1_65 = arith.constant 1 : index
    %c3_66 = arith.constant 3 : index
    %151 = memref.load %arg0[%c1_65, %c3_66] : memref<2x8xi32, #tpu.memory_space<smem>>
    %c1_67 = arith.constant 1 : index
    %c3_68 = arith.constant 3 : index
    %152 = memref.load %arg1[%c1_67, %c3_68] : memref<2x8xi32, #tpu.memory_space<smem>>
    %153 = arith.sitofp %152 : i32 to f32
    %154 = arith.index_cast %151 : i32 to index
    %c0_69 = arith.constant 0 : index
    %155 = vector.load %arg3[%154, %c0_69] : memref<32x128xf32, #tpu.memory_space<vmem>>, vector<1x128xf32>
    %156 = vector.broadcast %153 : f32 to vector<1x128xf32>
    %157 = arith.mulf %156, %155 : vector<1x128xf32>
    %158 = arith.addf %149, %157 : vector<1x128xf32>
    %159 = arith.addf %150, %153 : f32
    %c1_70 = arith.constant 1 : index
    %c4_71 = arith.constant 4 : index
    %160 = memref.load %arg0[%c1_70, %c4_71] : memref<2x8xi32, #tpu.memory_space<smem>>
    %c1_72 = arith.constant 1 : index
    %c4_73 = arith.constant 4 : index
    %161 = memref.load %arg1[%c1_72, %c4_73] : memref<2x8xi32, #tpu.memory_space<smem>>
    %162 = arith.sitofp %161 : i32 to f32
    %163 = arith.index_cast %160 : i32 to index
    %c0_74 = arith.constant 0 : index
    %164 = vector.load %arg3[%163, %c0_74] : memref<32x128xf32, #tpu.memory_space<vmem>>, vector<1x128xf32>
    %165 = vector.broadcast %162 : f32 to vector<1x128xf32>
    %166 = arith.mulf %165, %164 : vector<1x128xf32>
    %167 = arith.addf %158, %166 : vector<1x128xf32>
    %168 = arith.addf %159, %162 : f32
    %c1_75 = arith.constant 1 : index
    %c5_76 = arith.constant 5 : index
    %169 = memref.load %arg0[%c1_75, %c5_76] : memref<2x8xi32, #tpu.memory_space<smem>>
    %c1_77 = arith.constant 1 : index
    %c5_78 = arith.constant 5 : index
    %170 = memref.load %arg1[%c1_77, %c5_78] : memref<2x8xi32, #tpu.memory_space<smem>>
    %171 = arith.sitofp %170 : i32 to f32
    %172 = arith.index_cast %169 : i32 to index
    %c0_79 = arith.constant 0 : index
    %173 = vector.load %arg3[%172, %c0_79] : memref<32x128xf32, #tpu.memory_space<vmem>>, vector<1x128xf32>
    %174 = vector.broadcast %171 : f32 to vector<1x128xf32>
    %175 = arith.mulf %174, %173 : vector<1x128xf32>
    %176 = arith.addf %167, %175 : vector<1x128xf32>
    %177 = arith.addf %168, %171 : f32
    %c1_80 = arith.constant 1 : index
    %c6_81 = arith.constant 6 : index
    %178 = memref.load %arg0[%c1_80, %c6_81] : memref<2x8xi32, #tpu.memory_space<smem>>
    %c1_82 = arith.constant 1 : index
    %c6_83 = arith.constant 6 : index
    %179 = memref.load %arg1[%c1_82, %c6_83] : memref<2x8xi32, #tpu.memory_space<smem>>
    %180 = arith.sitofp %179 : i32 to f32
    %181 = arith.index_cast %178 : i32 to index
    %c0_84 = arith.constant 0 : index
    %182 = vector.load %arg3[%181, %c0_84] : memref<32x128xf32, #tpu.memory_space<vmem>>, vector<1x128xf32>
    %183 = vector.broadcast %180 : f32 to vector<1x128xf32>
    %184 = arith.mulf %183, %182 : vector<1x128xf32>
    %185 = arith.addf %176, %184 : vector<1x128xf32>
    %186 = arith.addf %177, %180 : f32
    %c1_85 = arith.constant 1 : index
    %c7_86 = arith.constant 7 : index
    %187 = memref.load %arg0[%c1_85, %c7_86] : memref<2x8xi32, #tpu.memory_space<smem>>
    %c1_87 = arith.constant 1 : index
    %c7_88 = arith.constant 7 : index
    %188 = memref.load %arg1[%c1_87, %c7_88] : memref<2x8xi32, #tpu.memory_space<smem>>
    %189 = arith.sitofp %188 : i32 to f32
    %190 = arith.index_cast %187 : i32 to index
    %c0_89 = arith.constant 0 : index
    %191 = vector.load %arg3[%190, %c0_89] : memref<32x128xf32, #tpu.memory_space<vmem>>, vector<1x128xf32>
    %192 = vector.broadcast %189 : f32 to vector<1x128xf32>
    %193 = arith.mulf %192, %191 : vector<1x128xf32>
    %194 = arith.addf %185, %193 : vector<1x128xf32>
    %195 = arith.addf %186, %189 : f32
    %cst_90 = arith.constant 1.000000e+00 : f32
    %196 = arith.maximumf %195, %cst_90 : f32
    %197 = vector.broadcast %196 : f32 to vector<1x128xf32>
    %198 = arith.divf %194, %197 : vector<1x128xf32>
    %c1_i32 = arith.constant 1 : i32
    %199 = vector.broadcast %c1_i32 : i32 to vector<8x128xi32>
    %200 = arith.cmpi eq, %0, %199 : vector<8x128xi32>
    %201 = vector.shape_cast %198 : vector<1x128xf32> to vector<1x128xf32>
    %202 = vector.broadcast %201 : vector<1x128xf32> to vector<8x128xf32>
    %203 = arith.select %200, %202, %122 : vector<8x128xi1>, vector<8x128xf32>
    %c1_91 = arith.constant 1 : index
    %c0_92 = arith.constant 0 : index
    %204 = vector.load %arg4[%c1_91, %c0_92] : memref<2x768xf32, #tpu.memory_space<vmem>>, vector<1x256xf32>
    %205 = vector.shape_cast %204 : vector<1x256xf32> to vector<1x1x256xf32>
    %cst_93 = arith.constant dense<0.000000e+00> : vector<1xf32>
    %206 = vector.multi_reduction <add>, %205, %cst_93 [1, 2] : vector<1x1x256xf32> to vector<1xf32>
    %207 = vector.shape_cast %206 : vector<1xf32> to vector<1x1x1xf32>
    %208 = vector.extract %207[0, 0, 0] : f32 from vector<1x1x1xf32>
    %cst_94 = arith.constant 3.906250e-03 : f32
    %209 = arith.mulf %208, %cst_94 : f32
    %c1_i32_95 = arith.constant 1 : i32
    %210 = vector.broadcast %c1_i32_95 : i32 to vector<8x128xi32>
    %211 = arith.cmpi eq, %0, %210 : vector<8x128xi32>
    %c32_i32_96 = arith.constant 32 : i32
    %212 = vector.broadcast %c32_i32_96 : i32 to vector<8x128xi32>
    %213 = arith.cmpi eq, %1, %212 : vector<8x128xi32>
    %214 = arith.andi %211, %213 : vector<8x128xi1>
    %215 = vector.broadcast %209 : f32 to vector<8x128xf32>
    %216 = arith.select %214, %215, %203 : vector<8x128xi1>, vector<8x128xf32>
    %c1_97 = arith.constant 1 : index
    %c256_98 = arith.constant 256 : index
    %217 = vector.load %arg4[%c1_97, %c256_98] : memref<2x768xf32, #tpu.memory_space<vmem>>, vector<1x256xf32>
    %218 = vector.shape_cast %217 : vector<1x256xf32> to vector<1x1x256xf32>
    %cst_99 = arith.constant dense<0.000000e+00> : vector<1xf32>
    %219 = vector.multi_reduction <add>, %218, %cst_99 [1, 2] : vector<1x1x256xf32> to vector<1xf32>
    %220 = vector.shape_cast %219 : vector<1xf32> to vector<1x1x1xf32>
    %221 = vector.extract %220[0, 0, 0] : f32 from vector<1x1x1xf32>
    %cst_100 = arith.constant 3.906250e-03 : f32
    %222 = arith.mulf %221, %cst_100 : f32
    %c1_i32_101 = arith.constant 1 : i32
    %223 = vector.broadcast %c1_i32_101 : i32 to vector<8x128xi32>
    %224 = arith.cmpi eq, %0, %223 : vector<8x128xi32>
    %c33_i32_102 = arith.constant 33 : i32
    %225 = vector.broadcast %c33_i32_102 : i32 to vector<8x128xi32>
    %226 = arith.cmpi eq, %1, %225 : vector<8x128xi32>
    %227 = arith.andi %224, %226 : vector<8x128xi1>
    %228 = vector.broadcast %222 : f32 to vector<8x128xf32>
    %229 = arith.select %227, %228, %216 : vector<8x128xi1>, vector<8x128xf32>
    %c1_103 = arith.constant 1 : index
    %c512_104 = arith.constant 512 : index
    %230 = vector.load %arg4[%c1_103, %c512_104] : memref<2x768xf32, #tpu.memory_space<vmem>>, vector<1x256xf32>
    %231 = vector.shape_cast %230 : vector<1x256xf32> to vector<1x1x256xf32>
    %cst_105 = arith.constant dense<0.000000e+00> : vector<1xf32>
    %232 = vector.multi_reduction <add>, %231, %cst_105 [1, 2] : vector<1x1x256xf32> to vector<1xf32>
    %233 = vector.shape_cast %232 : vector<1xf32> to vector<1x1x1xf32>
    %234 = vector.extract %233[0, 0, 0] : f32 from vector<1x1x1xf32>
    %cst_106 = arith.constant 3.906250e-03 : f32
    %235 = arith.mulf %234, %cst_106 : f32
    %c1_i32_107 = arith.constant 1 : i32
    %236 = vector.broadcast %c1_i32_107 : i32 to vector<8x128xi32>
    %237 = arith.cmpi eq, %0, %236 : vector<8x128xi32>
    %c34_i32_108 = arith.constant 34 : i32
    %238 = vector.broadcast %c34_i32_108 : i32 to vector<8x128xi32>
    %239 = arith.cmpi eq, %1, %238 : vector<8x128xi32>
    %240 = arith.andi %237, %239 : vector<8x128xi1>
    %241 = vector.broadcast %235 : f32 to vector<8x128xf32>
    %242 = arith.select %240, %241, %229 : vector<8x128xi1>, vector<8x128xf32>
    %c0_109 = arith.constant 0 : index
    %c0_110 = arith.constant 0 : index
    %243 = vector.load %arg5[%c0_109, %c0_110] : memref<544x128xf32, #tpu.memory_space<vmem>>, vector<128x128xf32>
    %c512_111 = arith.constant 512 : index
    %c0_112 = arith.constant 0 : index
    %244 = vector.load %arg5[%c512_111, %c0_112] : memref<544x128xf32, #tpu.memory_space<vmem>>, vector<1x128xf32>
    %cst_113 = arith.constant dense<0.000000e+00> : vector<8x128xf32>
    %245 = tpu.matmul %242, %243, %cst_113 {dimension_numbers = #tpu.dot_dimension_numbers<[1], [0], [0], [1], [0, 0, 1, 1], [], []>} : vector<8x128xf32>, vector<128x128xf32>, vector<8x128xf32> -> vector<8x128xf32>
    %246 = vector.broadcast %244 : vector<1x128xf32> to vector<8x128xf32>
    %247 = arith.addf %245, %246 : vector<8x128xf32>
    %c32_i32_114 = arith.constant 32 : i32
    %248 = vector.broadcast %c32_i32_114 : i32 to vector<8x128xi32>
    %249 = arith.cmpi slt, %1, %248 : vector<8x128xi32>
    %250 = math.tanh %247 : vector<8x128xf32>
    %cst_115 = arith.constant 0.000000e+00 : f32
    %251 = vector.broadcast %cst_115 : f32 to vector<8x128xf32>
    %252 = arith.maximumf %247, %251 : vector<8x128xf32>
    %253 = arith.select %249, %250, %252 : vector<8x128xi1>, vector<8x128xf32>
    %c128 = arith.constant 128 : index
    %c0_116 = arith.constant 0 : index
    %254 = vector.load %arg5[%c128, %c0_116] : memref<544x128xf32, #tpu.memory_space<vmem>>, vector<128x128xf32>
    %c520 = arith.constant 520 : index
    %c0_117 = arith.constant 0 : index
    %255 = vector.load %arg5[%c520, %c0_117] : memref<544x128xf32, #tpu.memory_space<vmem>>, vector<1x128xf32>
    %cst_118 = arith.constant dense<0.000000e+00> : vector<8x128xf32>
    %256 = tpu.matmul %253, %254, %cst_118 {dimension_numbers = #tpu.dot_dimension_numbers<[1], [0], [0], [1], [0, 0, 1, 1], [], []>} : vector<8x128xf32>, vector<128x128xf32>, vector<8x128xf32> -> vector<8x128xf32>
    %257 = vector.broadcast %255 : vector<1x128xf32> to vector<8x128xf32>
    %258 = arith.addf %256, %257 : vector<8x128xf32>
    %cst_119 = arith.constant 0.000000e+00 : f32
    %259 = vector.broadcast %cst_119 : f32 to vector<8x128xf32>
    %260 = arith.maximumf %258, %259 : vector<8x128xf32>
    %c256_120 = arith.constant 256 : index
    %c0_121 = arith.constant 0 : index
    %261 = vector.load %arg5[%c256_120, %c0_121] : memref<544x128xf32, #tpu.memory_space<vmem>>, vector<128x128xf32>
    %c528 = arith.constant 528 : index
    %c0_122 = arith.constant 0 : index
    %262 = vector.load %arg5[%c528, %c0_122] : memref<544x128xf32, #tpu.memory_space<vmem>>, vector<1x128xf32>
    %cst_123 = arith.constant dense<0.000000e+00> : vector<8x128xf32>
    %263 = tpu.matmul %260, %261, %cst_123 {dimension_numbers = #tpu.dot_dimension_numbers<[1], [0], [0], [1], [0, 0, 1, 1], [], []>} : vector<8x128xf32>, vector<128x128xf32>, vector<8x128xf32> -> vector<8x128xf32>
    %264 = vector.broadcast %262 : vector<1x128xf32> to vector<8x128xf32>
    %265 = arith.addf %263, %264 : vector<8x128xf32>
    %cst_124 = arith.constant 0.000000e+00 : f32
    %266 = vector.broadcast %cst_124 : f32 to vector<8x128xf32>
    %267 = arith.maximumf %265, %266 : vector<8x128xf32>
    %c384 = arith.constant 384 : index
    %c0_125 = arith.constant 0 : index
    %268 = vector.load %arg5[%c384, %c0_125] : memref<544x128xf32, #tpu.memory_space<vmem>>, vector<128x128xf32>
    %c536 = arith.constant 536 : index
    %c0_126 = arith.constant 0 : index
    %269 = vector.load %arg5[%c536, %c0_126] : memref<544x128xf32, #tpu.memory_space<vmem>>, vector<1x128xf32>
    %cst_127 = arith.constant dense<0.000000e+00> : vector<8x128xf32>
    %270 = tpu.matmul %267, %268, %cst_127 {dimension_numbers = #tpu.dot_dimension_numbers<[1], [0], [0], [1], [0, 0, 1, 1], [], []>} : vector<8x128xf32>, vector<128x128xf32>, vector<8x128xf32> -> vector<8x128xf32>
    %271 = vector.broadcast %269 : vector<1x128xf32> to vector<8x128xf32>
    %272 = arith.addf %270, %271 : vector<8x128xf32>
    %c4_i32 = arith.constant 4 : i32
    %273 = vector.broadcast %c4_i32 : i32 to vector<8x128xi32>
    %274 = arith.cmpi slt, %1, %273 : vector<8x128xi32>
    %cst_128 = arith.constant -1.000000e+30 : f32
    %275 = vector.broadcast %cst_128 : f32 to vector<8x128xf32>
    %276 = arith.select %274, %272, %275 : vector<8x128xi1>, vector<8x128xf32>
    %cst_129 = arith.constant dense<0xFF800000> : vector<8xf32>
    %277 = vector.multi_reduction <maximumf>, %276, %cst_129 [1] : vector<8x128xf32> to vector<8xf32>
    %278 = vector.shape_cast %277 : vector<8xf32> to vector<8x1xf32>
    %279 = vector.broadcast %278 : vector<8x1xf32> to vector<8x128xf32>
    %280 = arith.cmpf oeq, %276, %279 : vector<8x128xf32>
    %c128_i32 = arith.constant 128 : i32
    %281 = vector.broadcast %c128_i32 : i32 to vector<8x128xi32>
    %282 = arith.select %280, %1, %281 : vector<8x128xi1>, vector<8x128xi32>
    %cst_130 = arith.constant dense<2147483647> : vector<8xi32>
    %283 = vector.multi_reduction <minsi>, %282, %cst_130 [1] : vector<8x128xi32> to vector<8xi32>
    %284 = vector.shape_cast %283 : vector<8xi32> to vector<8x1xi32>
    %285 = vector.broadcast %278 : vector<8x1xf32> to vector<8x128xf32>
    %286 = arith.subf %276, %285 : vector<8x128xf32>
    %287 = math.exp %286 : vector<8x128xf32>
    %cst_131 = arith.constant dense<0.000000e+00> : vector<8xf32>
    %288 = vector.multi_reduction <add>, %287, %cst_131 [1] : vector<8x128xf32> to vector<8xf32>
    %289 = vector.shape_cast %288 : vector<8xf32> to vector<8x1xf32>
    %290 = math.log %289 : vector<8x1xf32>
    %291 = arith.addf %290, %278 : vector<8x1xf32>
    %c0_i32_132 = arith.constant 0 : i32
    %292 = vector.broadcast %c0_i32_132 : i32 to vector<8x128xi32>
    %c0_i32_133 = arith.constant 0 : i32
    %293 = vector.broadcast %c0_i32_133 : i32 to vector<8x128xi32>
    %294 = arith.cmpi eq, %0, %293 : vector<8x128xi32>
    %c0_134 = arith.constant 0 : index
    %295 = memref.load %arg2[%c0_134] : memref<2xi32, #tpu.memory_space<smem>>
    %296 = vector.broadcast %295 : i32 to vector<8x128xi32>
    %297 = arith.select %294, %296, %292 : vector<8x128xi1>, vector<8x128xi32>
    %c1_i32_135 = arith.constant 1 : i32
    %298 = vector.broadcast %c1_i32_135 : i32 to vector<8x128xi32>
    %299 = arith.cmpi eq, %0, %298 : vector<8x128xi32>
    %c1_136 = arith.constant 1 : index
    %300 = memref.load %arg2[%c1_136] : memref<2xi32, #tpu.memory_space<smem>>
    %301 = vector.broadcast %300 : i32 to vector<8x128xi32>
    %302 = arith.select %299, %301, %297 : vector<8x128xi1>, vector<8x128xi32>
    %303 = arith.cmpi eq, %1, %302 : vector<8x128xi32>
    %cst_137 = arith.constant 0.000000e+00 : f32
    %304 = vector.broadcast %cst_137 : f32 to vector<8x128xf32>
    %305 = arith.select %303, %272, %304 : vector<8x128xi1>, vector<8x128xf32>
    %cst_138 = arith.constant dense<0.000000e+00> : vector<8xf32>
    %306 = vector.multi_reduction <add>, %305, %cst_138 [1] : vector<8x128xf32> to vector<8xf32>
    %307 = vector.shape_cast %306 : vector<8xf32> to vector<8x1xf32>
    %308 = arith.subf %291, %307 : vector<8x1xf32>
    %309 = vector.extract_strided_slice %0 {offsets = [0, 0], sizes = [8, 1], strides = [1, 1]} : vector<8x128xi32> to vector<8x1xi32>
    %c2_i32 = arith.constant 2 : i32
    %310 = vector.broadcast %c2_i32 : i32 to vector<8x1xi32>
    %311 = arith.cmpi slt, %309, %310 : vector<8x1xi32>
    %cst_139 = arith.constant 0.000000e+00 : f32
    %312 = vector.broadcast %cst_139 : f32 to vector<8x1xf32>
    %313 = arith.select %311, %308, %312 : vector<8x1xi1>, vector<8x1xf32>
    %314 = vector.shape_cast %313 : vector<8x1xf32> to vector<1x8x1xf32>
    %cst_140 = arith.constant dense<0.000000e+00> : vector<1xf32>
    %315 = vector.multi_reduction <add>, %314, %cst_140 [1, 2] : vector<1x8x1xf32> to vector<1xf32>
    %316 = vector.shape_cast %315 : vector<1xf32> to vector<1x1x1xf32>
    %317 = vector.extract %316[0, 0, 0] : f32 from vector<1x1x1xf32>
    %cst_141 = arith.constant 5.000000e-01 : f32
    %318 = arith.mulf %317, %cst_141 : f32
    %c0_i32_142 = arith.constant 0 : i32
    %319 = vector.broadcast %c0_i32_142 : i32 to vector<8x128xi32>
    %320 = arith.cmpi eq, %1, %319 : vector<8x128xi32>
    %321 = arith.sitofp %284 : vector<8x1xi32> to vector<8x1xf32>
    %322 = vector.shape_cast %321 : vector<8x1xf32> to vector<8x1xf32>
    %323 = vector.broadcast %322 : vector<8x1xf32> to vector<8x128xf32>
    %324 = vector.broadcast %318 : f32 to vector<8x128xf32>
    %325 = arith.select %320, %323, %324 : vector<8x128xi1>, vector<8x128xf32>
    %c0_143 = arith.constant 0 : index
    %c0_144 = arith.constant 0 : index
    %326 = vector.load %arg6[%c0_143, %c0_144] : memref<8x128xf32, #tpu.memory_space<vmem>>, vector<8x128xf32>
    tpu.vector_store %arg6[%c0_143, %c0_144], %325 {strides = array<i32>} : memref<8x128xf32, #tpu.memory_space<vmem>>, vector<8x128xf32>,
    return
  }
}

</mosaic_0001>

<llo_original>
// kernel: model_forward.1
$region0: #{model_forward.1}
  #allocation0 [shape = 'u32[]', space=smem, size = 0x4, offset = 0x4, fixed_abs, tag = 'smem constant byte address 0x4 - core index']
  #allocation1 [shape = 'u32[72,128]{1,0:T(1,128)}', space=vmem, size = 0x9000, scoped, tag = 'internal scratch']
  %s0 = inlined_call_operand.vmem [shape: s32[2,8], index: 0, kind: input, shape index: {}]
  %s1 = inlined_call_operand.vmem [shape: s32[2,8], index: 1, kind: input, shape index: {}]
  %s2 = inlined_call_operand.vmem [shape: s32[2], index: 2, kind: input, shape index: {}]
  %s3 = inlined_call_operand.vmem [shape: f32[32,128], index: 3, kind: input, shape index: {}]
  %s4 = inlined_call_operand.vmem [shape: f32[2,768], index: 4, kind: input, shape index: {}]
  %s5 = inlined_call_operand.hbm [shape: f32[544,128], index: 5, kind: input, shape index: {}]
  %s6 = inlined_call_operand.vmem [shape: f32[8,128], index: 6, kind: output, shape index: {}]
  %s7 = sld [smem:[#allocation0]]
  $region50: #{model_forward.1} parent=0
    _
  %s9 = ssub.s32 1, %s7
  %s10 = scalar_select 0, %s9, %s7
  $region1: #{model_forward.1} parent=0
    #allocation2 [shape = 'u8[1024]{0}', space=smem, size = 0x400, scoped, tag = 'input window, operand 0, single buffered']
    #allocation3 [shape = 's32[1]{0}', space=sflag, size = 0x4, scoped, tag = 'scoped memory for model_forward.1']
    #allocation4 [shape = 's32[1]{0}', space=sflag, size = 0x4, scoped, tag = 'scoped memory for model_forward.1']
    #allocation5 [shape = 'u8[1024]{0}', space=smem, size = 0x400, scoped, tag = 'input window, operand 1, single buffered']
    #allocation6 [shape = 's32[1]{0}', space=sflag, size = 0x4, scoped, tag = 'scoped memory for model_forward.1']
    #allocation7 [shape = 'u8[512]{0}', space=smem, size = 0x200, scoped, tag = 'input window, operand 2, single buffered']
    #allocation8 [shape = 'u8[278528]{0}', space=vmem, size = 0x44000, scoped, tag = 'input window, operand 5, single buffered']
    %11 = vsyncpa [#allocation4], 0
    %12 = vsyncpa [#allocation6], 0
    %13 = vsyncpa [#allocation3], 0
    // Predicated region
    $region2: #{model_forward.1} parent=1 // pred_check
      _
    $region3: #{model_forward.1} parent=1 // pred_check_branch
      %15 = sbr.rel (0) target = $region5
    $region4: #{model_forward.1} parent=1 // pred_region
      %17 = vsyncadd [#allocation4], 0
      %s19 = sshll.u32 %s0, 4
      %s20 = int_to_ptr.vmem [resolvable:$true] %s19
      %22 = dma.vmem_to_smem %s20, 32, [#allocation2], [#allocation4]
    $region5: #{model_forward.1} parent=1 // pred_fallthru
      _
    // Predicated region
    $region6: #{model_forward.1} parent=1 // pred_check
      _
    $region7: #{model_forward.1} parent=1 // pred_check_branch
      %24 = sbr.rel (0) target = $region9
    $region8: #{model_forward.1} parent=1 // pred_region
      %26 = vsyncadd [#allocation6], 0
      %s28 = sshll.u32 %s1, 4
      %s29 = int_to_ptr.vmem [resolvable:$true] %s28
      %31 = dma.vmem_to_smem %s29, 32, [#allocation5], [#allocation6]
    $region9: #{model_forward.1} parent=1 // pred_fallthru
      _
    // Predicated region
    $region10: #{model_forward.1} parent=1 // pred_check
      _
    $region11: #{model_forward.1} parent=1 // pred_check_branch
      %33 = sbr.rel (0) target = $region13
    $region12: #{model_forward.1} parent=1 // pred_region
      %35 = vsyncadd [#allocation6], 0
      %s37 = sshll.u32 %s2, 4
      %s38 = int_to_ptr.vmem [resolvable:$true] %s37
      %40 = dma.vmem_to_smem %s38, 16, [#allocation7], [#allocation6]
    $region13: #{model_forward.1} parent=1 // pred_fallthru
      _
    // Predicated region
    $region14: #{model_forward.1} parent=1 // pred_check
      _
    $region15: #{model_forward.1} parent=1 // pred_check_branch
      %42 = sbr.rel (0) target = $region17
    $region16: #{model_forward.1} parent=1 // pred_region
      _
    $region17: #{model_forward.1} parent=1 // pred_fallthru
      _
    // Predicated region
    $region18: #{model_forward.1} parent=1 // pred_check
      _
    $region19: #{model_forward.1} parent=1 // pred_check_branch
      %44 = sbr.rel (0) target = $region21
    $region20: #{model_forward.1} parent=1 // pred_region
      _
    $region21: #{model_forward.1} parent=1 // pred_fallthru
      _
    // Predicated region
    $region22: #{model_forward.1} parent=1 // pred_check
      _
    $region23: #{model_forward.1} parent=1 // pred_check_branch
      %46 = sbr.rel (0) target = $region25
    $region24: #{model_forward.1} parent=1 // pred_region
      %48 = vsyncadd [#allocation3], 0
      %s49 = sshll.u32 %s5, 4
      %s50 = int_to_ptr.hbm [resolvable:$true] %s49
      %s51 = sshll.u32 [#allocation8], 4
      %s52 = int_to_ptr.vmem [resolvable:$true] %s51
      %57 = dma.hbm_to_vmem [thread:$0]  %s50, 8704, %s52, [#allocation3], 128, 128, 8
    $region25: #{model_forward.1} parent=1 // pred_fallthru
      _
    // Predicated region
    $region26: #{model_forward.1} parent=1 // pred_check
      _
    $region27: #{model_forward.1} parent=1 // pred_check_branch
      %59 = sbr.rel (0) target = $region29
    $region28: #{model_forward.1} parent=1 // pred_region
      %61 = dma.done [#allocation4], 32
    $region29: #{model_forward.1} parent=1 // pred_fallthru
      _
    // Predicated region
    $region30: #{model_forward.1} parent=1 // pred_check
      _
    $region31: #{model_forward.1} parent=1 // pred_check_branch
      %63 = sbr.rel (0) target = $region33
    $region32: #{model_forward.1} parent=1 // pred_region
      %65 = dma.done [#allocation6], 32
    $region33: #{model_forward.1} parent=1 // pred_fallthru
      _
    // Predicated region
    $region34: #{model_forward.1} parent=1 // pred_check
      _
    $region35: #{model_forward.1} parent=1 // pred_check_branch
      %67 = sbr.rel (0) target = $region37
    $region36: #{model_forward.1} parent=1 // pred_region
      %69 = dma.done [#allocation6], 16
    $region37: #{model_forward.1} parent=1 // pred_fallthru
      _
    // Predicated region
    $region38: #{model_forward.1} parent=1 // pred_check
      _
    $region39: #{model_forward.1} parent=1 // pred_check_branch
      %71 = sbr.rel (0) target = $region41
    $region40: #{model_forward.1} parent=1 // pred_region
      %73 = dma.done [#allocation3], 8704
    $region41: #{model_forward.1} parent=1 // pred_fallthru
      _
    %74 = sfence
    %v75 = vlaneseq
    %v76 = vshrl.u32 %v75, 7
    %v77 = vlaneseq
    %v78 = vand.u32 %v77, 127
    %s79 = sld [smem:[#allocation2]]
    %s80 = sld [smem:[#allocation5]]
    %s81 = scvt.s32.f32 %s80
    %s82 = scalar_lea.vmem %s3, %s79
    %v83 = vld [vmem:[%s82] sm:$0x1]
    %v84 = vstv %s81
    %v85 = vmul.f32 %v84, %v83
    %v86 = vadd.f32 %v85, 0.0
    %s87 = sadd.f32 %s81, 0.0
    %s88 = sld [smem:[#allocation2 + $0x1]]
    %s89 = sld [smem:[#allocation5 + $0x1]]
    %s90 = scvt.s32.f32 %s89
    %s91 = scalar_lea.vmem %s3, %s88
    %v92 = vld [vmem:[%s91] sm:$0x1]
    %v93 = vstv %s90
    %v94 = vmul.f32 %v93, %v92
    %v95 = vadd.f32 %v86, %v94
    %s96 = sadd.f32 %s87, %s90
    %s97 = sld [smem:[#allocation2 + $0x2]]
    %s98 = sld [smem:[#allocation5 + $0x2]]
    %s99 = scvt.s32.f32 %s98
    %s100 = scalar_lea.vmem %s3, %s97
    %v101 = vld [vmem:[%s100] sm:$0x1]
    %v102 = vstv %s99
    %v103 = vmul.f32 %v102, %v101
    %v104 = vadd.f32 %v95, %v103
    %s105 = sadd.f32 %s96, %s99
    %s106 = sld [smem:[#allocation2 + $0x3]]
    %s107 = sld [smem:[#allocation5 + $0x3]]
    %s108 = scvt.s32.f32 %s107
    %s109 = scalar_lea.vmem %s3, %s106
    %v110 = vld [vmem:[%s109] sm:$0x1]
    %v111 = vstv %s108
    %v112 = vmul.f32 %v111, %v110
    %v113 = vadd.f32 %v104, %v112
    %s114 = sadd.f32 %s105, %s108
    %s115 = sld [smem:[#allocation2 + $0x4]]
    %s116 = sld [smem:[#allocation5 + $0x4]]
    %s117 = scvt.s32.f32 %s116
    %s118 = scalar_lea.vmem %s3, %s115
    %v119 = vld [vmem:[%s118] sm:$0x1]
    %v120 = vstv %s117
    %v121 = vmul.f32 %v120, %v119
    %v122 = vadd.f32 %v113, %v121
    %s123 = sadd.f32 %s114, %s117
    %s124 = sld [smem:[#allocation2 + $0x5]]
    %s125 = sld [smem:[#allocation5 + $0x5]]
    %s126 = scvt.s32.f32 %s125
    %s127 = scalar_lea.vmem %s3, %s124
    %v128 = vld [vmem:[%s127] sm:$0x1]
    %v129 = vstv %s126
    %v130 = vmul.f32 %v129, %v128
    %v131 = vadd.f32 %v122, %v130
    %s132 = sadd.f32 %s123, %s126
    %s133 = sld [smem:[#allocation2 + $0x6]]
    %s134 = sld [smem:[#allocation5 + $0x6]]
    %s135 = scvt.s32.f32 %s134
    %s136 = scalar_lea.vmem %s3, %s133
    %v137 = vld [vmem:[%s136] sm:$0x1]
    %v138 = vstv %s135
    %v139 = vmul.f32 %v138, %v137
    %v140 = vadd.f32 %v131, %v139
    %s141 = sadd.f32 %s132, %s135
    %s142 = sld [smem:[#allocation2 + $0x7]]
    %s143 = sld [smem:[#allocation5 + $0x7]]
    %s144 = scvt.s32.f32 %s143
    %s145 = scalar_lea.vmem %s3, %s142
    %v146 = vld [vmem:[%s145] sm:$0x1]
    %v147 = vstv %s144
    %v148 = vmul.f32 %v147, %v146
    %v149 = vadd.f32 %v140, %v148
    %s150 = sadd.f32 %s141, %s144
    %s151 = smax.f32 %s150, 1.0
    %v152 = vstv %s151
    %v153 = vrcp.pop %v152
    %v154 = vmul.f32 %v152, %v153
    %v155 = vsub.f32 1.0, %v154
    %v156 = vmul.f32 %v153, %v155
    %v157 = vadd.f32 %v153, %v156
    %vm158 = vweird.f32 %v152
    %vm159 = vweird.f32 %v153
    %vm160 = vmor %vm158, %vm159
    %v161 = vsel %vm160, %v153, %v157
    %v162 = vand.u32 2147483647, %v152
    %vm163 = vcmp.eq.f32.partialorder %v162, 8.507059e+37
    %v164 = vand.u32 %v152, 2147483648
    %v165 = vor.u32 1.1754944e-38, %v164
    %v166 = vsel %vm163, %v165, %v161
    %v167 = vmul.f32 %v149, %v166
    %vm168 = vcmp.eq.s32.totalorder %v76, 0
    %v169 = vperm.slane %v167, 0
    %v170 = vsel %vm168, %v169, 0.0
    %v171 = vld [vmem:[%s4] ss:$2 sm:$0x3]
    %v173 = vperm.slane %v171, 0
    %v174 = vperm.slane %v171, 1
    %vm177 = vcmask 1040384
    %v178 = vsel %vm177, %v173, 0.0
    %v179 = vsel %vm177, %v174, 0.0
    %v180 = vadd.f32 %v178, %v179
    %181 = vadd.xlane.f32.xlu0 %v180
    %v182 = vpop.xlane.xlu0 %181
    %v183 = vrot.slane %v182, 4
    %v184 = vadd.f32 %v182, %v183
    %v185 = vrot.slane %v184, 2
    %v186 = vadd.f32 %v184, %v185
    %v187 = vrot.slane %v186, 1
    %v188 = vadd.f32 %v186, %v187
    %s189 = vtos %v188
    %s190 = smul.f32 %s189, 0.00390625
    %vm191 = vcmp.eq.s32.totalorder %v78, 32
    %vm192 = vmand %vm168, %vm191
    %v193 = vstv %s190
    %v194 = vsel %vm192, %v193, %v170
    %s195 = scalar_lea.vmem %s4, 4
    %v196 = vld [vmem:[%s195] ss:$2 sm:$0x3]
    %v198 = vperm.slane %v196, 0
    %v199 = vperm.slane %v196, 1
    %v202 = vsel %vm177, %v198, 0.0
    %v203 = vsel %vm177, %v199, 0.0
    %v204 = vadd.f32 %v202, %v203
    %205 = vadd.xlane.f32.xlu0 %v204
    %v206 = vpop.xlane.xlu0 %205
    %v207 = vrot.slane %v206, 4
    %v208 = vadd.f32 %v206, %v207
    %v209 = vrot.slane %v208, 2
    %v210 = vadd.f32 %v208, %v209
    %v211 = vrot.slane %v210, 1
    %v212 = vadd.f32 %v210, %v211
    %s213 = vtos %v212
    %s214 = smul.f32 %s213, 0.00390625
    %vm215 = vcmp.eq.s32.totalorder %v78, 33
    %vm216 = vmand %vm168, %vm215
    %v217 = vstv %s214
    %v218 = vsel %vm216, %v217, %v194
    %s219 = scalar_lea.vmem %s4, 8
    %v220 = vld [vmem:[%s219] ss:$2 sm:$0x3]
    %v222 = vperm.slane %v220, 0
    %v223 = vperm.slane %v220, 1
    %v226 = vsel %vm177, %v222, 0.0
    %v227 = vsel %vm177, %v223, 0.0
    %v228 = vadd.f32 %v226, %v227
    %229 = vadd.xlane.f32.xlu0 %v228
    %v230 = vpop.xlane.xlu0 %229
    %v231 = vrot.slane %v230, 4
    %v232 = vadd.f32 %v230, %v231
    %v233 = vrot.slane %v232, 2
    %v234 = vadd.f32 %v232, %v233
    %v235 = vrot.slane %v234, 1
    %v236 = vadd.f32 %v234, %v235
    %s237 = vtos %v236
    %s238 = smul.f32 %s237, 0.00390625
    %vm239 = vcmp.eq.s32.totalorder %v78, 34
    %vm240 = vmand %vm168, %vm239
    %v241 = vstv %s238
    %v242 = vsel %vm240, %v241, %v218
    %s243 = sld [smem:[#allocation2 + $0x80]]
    %s244 = sld [smem:[#allocation5 + $0x80]]
    %s245 = scvt.s32.f32 %s244
    %s246 = scalar_lea.vmem %s3, %s243
    %v247 = vld [vmem:[%s246] sm:$0x1]
    %v248 = vstv %s245
    %v249 = vmul.f32 %v248, %v247
    %v250 = vadd.f32 %v249, 0.0
    %s251 = sadd.f32 %s245, 0.0
    %s252 = sld [smem:[#allocation2 + $0x81]]
    %s253 = sld [smem:[#allocation5 + $0x81]]
    %s254 = scvt.s32.f32 %s253
    %s255 = scalar_lea.vmem %s3, %s252
    %v256 = vld [vmem:[%s255] sm:$0x1]
    %v257 = vstv %s254
    %v258 = vmul.f32 %v257, %v256
    %v259 = vadd.f32 %v250, %v258
    %s260 = sadd.f32 %s251, %s254
    %s261 = sld [smem:[#allocation2 + $0x82]]
    %s262 = sld [smem:[#allocation5 + $0x82]]
    %s263 = scvt.s32.f32 %s262
    %s264 = scalar_lea.vmem %s3, %s261
    %v265 = vld [vmem:[%s264] sm:$0x1]
    %v266 = vstv %s263
    %v267 = vmul.f32 %v266, %v265
    %v268 = vadd.f32 %v259, %v267
    %s269 = sadd.f32 %s260, %s263
    %s270 = sld [smem:[#allocation2 + $0x83]]
    %s271 = sld [smem:[#allocation5 + $0x83]]
    %s272 = scvt.s32.f32 %s271
    %s273 = scalar_lea.vmem %s3, %s270
    %v274 = vld [vmem:[%s273] sm:$0x1]
    %v275 = vstv %s272
    %v276 = vmul.f32 %v275, %v274
    %v277 = vadd.f32 %v268, %v276
    %s278 = sadd.f32 %s269, %s272
    %s279 = sld [smem:[#allocation2 + $0x84]]
    %s280 = sld [smem:[#allocation5 + $0x84]]
    %s281 = scvt.s32.f32 %s280
    %s282 = scalar_lea.vmem %s3, %s279
    %v283 = vld [vmem:[%s282] sm:$0x1]
    %v284 = vstv %s281
    %v285 = vmul.f32 %v284, %v283
    %v286 = vadd.f32 %v277, %v285
    %s287 = sadd.f32 %s278, %s281
    %s288 = sld [smem:[#allocation2 + $0x85]]
    %s289 = sld [smem:[#allocation5 + $0x85]]
    %s290 = scvt.s32.f32 %s289
    %s291 = scalar_lea.vmem %s3, %s288
    %v292 = vld [vmem:[%s291] sm:$0x1]
    %v293 = vstv %s290
    %v294 = vmul.f32 %v293, %v292
    %v295 = vadd.f32 %v286, %v294
    %s296 = sadd.f32 %s287, %s290
    %s297 = sld [smem:[#allocation2 + $0x86]]
    %s298 = sld [smem:[#allocation5 + $0x86]]
    %s299 = scvt.s32.f32 %s298
    %s300 = scalar_lea.vmem %s3, %s297
    %v301 = vld [vmem:[%s300] sm:$0x1]
    %v302 = vstv %s299
    %v303 = vmul.f32 %v302, %v301
    %v304 = vadd.f32 %v295, %v303
    %s305 = sadd.f32 %s296, %s299
    %s306 = sld [smem:[#allocation2 + $0x87]]
    %s307 = sld [smem:[#allocation5 + $0x87]]
    %s308 = scvt.s32.f32 %s307
    %s309 = scalar_lea.vmem %s3, %s306
    %v310 = vld [vmem:[%s309] sm:$0x1]
    %v311 = vstv %s308
    %v312 = vmul.f32 %v311, %v310
    %v313 = vadd.f32 %v304, %v312
    %s314 = sadd.f32 %s305, %s308
    %s315 = smax.f32 %s314, 1.0
    %v316 = vstv %s315
    %v317 = vrcp.pop %v316
    %v318 = vmul.f32 %v316, %v317
    %v319 = vsub.f32 1.0, %v318
    %v320 = vmul.f32 %v317, %v319
    %v321 = vadd.f32 %v317, %v320
    %vm322 = vweird.f32 %v316
    %vm323 = vweird.f32 %v317
    %vm324 = vmor %vm322, %vm323
    %v325 = vsel %vm324, %v317, %v321
    %v326 = vand.u32 2147483647, %v316
    %vm327 = vcmp.eq.f32.partialorder %v326, 8.507059e+37
    %v328 = vand.u32 %v316, 2147483648
    %v329 = vor.u32 1.1754944e-38, %v328
    %v330 = vsel %vm327, %v329, %v325
    %v331 = vmul.f32 %v313, %v330
    %vm332 = vcmp.eq.s32.totalorder %v76, 1
    %v333 = vperm.slane %v331, 0
    %v334 = vsel %vm332, %v333, %v242
    %s335 = scalar_lea.vmem %s4, 1
    %v336 = vld [vmem:[%s335] ss:$2 sm:$0x3]
    %v338 = vperm.slane %v336, 0
    %v339 = vperm.slane %v336, 1
    %v342 = vsel %vm177, %v338, 0.0
    %v343 = vsel %vm177, %v339, 0.0
    %v344 = vadd.f32 %v342, %v343
    %345 = vadd.xlane.f32.xlu0 %v344
    %v346 = vpop.xlane.xlu0 %345
    %v347 = vrot.slane %v346, 4
    %v348 = vadd.f32 %v346, %v347
    %v349 = vrot.slane %v348, 2
    %v350 = vadd.f32 %v348, %v349
    %v351 = vrot.slane %v350, 1
    %v352 = vadd.f32 %v350, %v351
    %s353 = vtos %v352
    %s354 = smul.f32 %s353, 0.00390625
    %vm355 = vmand %vm332, %vm191
    %v356 = vstv %s354
    %v357 = vsel %vm355, %v356, %v334
    %s358 = scalar_lea.vmem %s4, 5
    %v359 = vld [vmem:[%s358] ss:$2 sm:$0x3]
    %v361 = vperm.slane %v359, 0
    %v362 = vperm.slane %v359, 1
    %v365 = vsel %vm177, %v361, 0.0
    %v366 = vsel %vm177, %v362, 0.0
    %v367 = vadd.f32 %v365, %v366
    %368 = vadd.xlane.f32.xlu0 %v367
    %v369 = vpop.xlane.xlu0 %368
    %v370 = vrot.slane %v369, 4
    %v371 = vadd.f32 %v369, %v370
    %v372 = vrot.slane %v371, 2
    %v373 = vadd.f32 %v371, %v372
    %v374 = vrot.slane %v373, 1
    %v375 = vadd.f32 %v373, %v374
    %s376 = vtos %v375
    %s377 = smul.f32 %s376, 0.00390625
    %vm378 = vmand %vm332, %vm215
    %v379 = vstv %s377
    %v380 = vsel %vm378, %v379, %v357
    %s381 = scalar_lea.vmem %s4, 9
    %v382 = vld [vmem:[%s381] ss:$2 sm:$0x3]
    %v384 = vperm.slane %v382, 0
    %v385 = vperm.slane %v382, 1
    %v388 = vsel %vm177, %v384, 0.0
    %v389 = vsel %vm177, %v385, 0.0
    %v390 = vadd.f32 %v388, %v389
    %391 = vadd.xlane.f32.xlu0 %v390
    %v392 = vpop.xlane.xlu0 %391
    %v393 = vrot.slane %v392, 4
    %v394 = vadd.f32 %v392, %v393
    %v395 = vrot.slane %v394, 2
    %v396 = vadd.f32 %v394, %v395
    %v397 = vrot.slane %v396, 1
    %v398 = vadd.f32 %v396, %v397
    %s399 = vtos %v398
    %s400 = smul.f32 %s399, 0.00390625
    %vm401 = vmand %vm332, %vm239
    %v402 = vstv %s400
    %v403 = vsel %vm401, %v402, %v380
    %v404 = vld [vmem:[#allocation8] sm:$0xff]
    %v405 = vld [vmem:[#allocation8 + $0x8] sm:$0xff]
    %v406 = vld [vmem:[#allocation8 + $0x10] sm:$0xff]
    %v407 = vld [vmem:[#allocation8 + $0x18] sm:$0xff]
    %v408 = vld [vmem:[#allocation8 + $0x20] sm:$0xff]
    %v409 = vld [vmem:[#allocation8 + $0x28] sm:$0xff]
    %v410 = vld [vmem:[#allocation8 + $0x30] sm:$0xff]
    %v411 = vld [vmem:[#allocation8 + $0x38] sm:$0xff]
    %v412 = vld [vmem:[#allocation8 + $0x40] sm:$0xff]
    %v413 = vld [vmem:[#allocation8 + $0x48] sm:$0xff]
    %v414 = vld [vmem:[#allocation8 + $0x50] sm:$0xff]
    %v415 = vld [vmem:[#allocation8 + $0x58] sm:$0xff]
    %v416 = vld [vmem:[#allocation8 + $0x60] sm:$0xff]
    %v417 = vld [vmem:[#allocation8 + $0x68] sm:$0xff]
    %v418 = vld [vmem:[#allocation8 + $0x70] sm:$0xff]
    %v419 = vld [vmem:[#allocation8 + $0x78] sm:$0xff]
    %v420 = vld [vmem:[#allocation8 + $0x200] sm:$0x1]
    %v421 = vperm.slane %v420, 0
    %422 = vmatpush.msra.mxu0 %v419
    %423 = vmatpush.msra.mxu0 %v418
    %424 = vmatpush.msra.mxu0 %v417
    %425 = vmatpush.msra.mxu0 %v416
    %426 = vmatpush.msra.mxu0 %v415
    %427 = vmatpush.msra.mxu0 %v414
    %428 = vmatpush.msra.mxu0 %v413
    %429 = vmatpush.msra.mxu0 %v412
    %430 = vmatpush.msra.mxu0 %v411
    %431 = vmatpush.msra.mxu0 %v410
    %432 = vmatpush.msra.mxu0 %v409
    %433 = vmatpush.msra.mxu0 %v408
    %434 = vmatpush.msra.mxu0 %v407
    %435 = vmatpush.msra.mxu0 %v406
    %436 = vmatpush.msra.mxu0 %v405
    %437 = vmatpush.msra.mxu0 %v404
    %438 = vmatmul.f32.gmra.mxu0 %v403
    %v439 = vpop.f32.mrf.mxu0
    %v440 = vadd.f32 %v421, %v439
    %441 = vdwg.mxu0
    %vm442 = vcmp.lt.s32.totalorder %v78, 32
    %v443 = vtanh.pop %v440
    %v444 = vmax.f32 %v440, 0.0
    %v445 = vsel %vm442, %v443, %v444
    %v446 = vld [vmem:[#allocation8 + $0x80] sm:$0xff]
    %v447 = vld [vmem:[#allocation8 + $0x88] sm:$0xff]
    %v448 = vld [vmem:[#allocation8 + $0x90] sm:$0xff]
    %v449 = vld [vmem:[#allocation8 + $0x98] sm:$0xff]
    %v450 = vld [vmem:[#allocation8 + $0xa0] sm:$0xff]
    %v451 = vld [vmem:[#allocation8 + $0xa8] sm:$0xff]
    %v452 = vld [vmem:[#allocation8 + $0xb0] sm:$0xff]
    %v453 = vld [vmem:[#allocation8 + $0xb8] sm:$0xff]
    %v454 = vld [vmem:[#allocation8 + $0xc0] sm:$0xff]
    %v455 = vld [vmem:[#allocation8 + $0xc8] sm:$0xff]
    %v456 = vld [vmem:[#allocation8 + $0xd0] sm:$0xff]
    %v457 = vld [vmem:[#allocation8 + $0xd8] sm:$0xff]
    %v458 = vld [vmem:[#allocation8 + $0xe0] sm:$0xff]
    %v459 = vld [vmem:[#allocation8 + $0xe8] sm:$0xff]
    %v460 = vld [vmem:[#allocation8 + $0xf0] sm:$0xff]
    %v461 = vld [vmem:[#allocation8 + $0xf8] sm:$0xff]
    %v462 = vld [vmem:[#allocation8 + $0x208] sm:$0x1]
    %v463 = vperm.slane %v462, 0
    %464 = vmatpush.msra.mxu0 %v461
    %465 = vmatpush.msra.mxu0 %v460
    %466 = vmatpush.msra.mxu0 %v459
    %467 = vmatpush.msra.mxu0 %v458
    %468 = vmatpush.msra.mxu0 %v457
    %469 = vmatpush.msra.mxu0 %v456
    %470 = vmatpush.msra.mxu0 %v455
    %471 = vmatpush.msra.mxu0 %v454
    %472 = vmatpush.msra.mxu0 %v453
    %473 = vmatpush.msra.mxu0 %v452
    %474 = vmatpush.msra.mxu0 %v451
    %475 = vmatpush.msra.mxu0 %v450
    %476 = vmatpush.msra.mxu0 %v449
    %477 = vmatpush.msra.mxu0 %v448
    %478 = vmatpush.msra.mxu0 %v447
    %479 = vmatpush.msra.mxu0 %v446
    %480 = vmatmul.f32.gmra.mxu0 %v445
    %v481 = vpop.f32.mrf.mxu0
    %v482 = vadd.f32 %v463, %v481
    %483 = vdwg.mxu0
    %v484 = vmax.f32 %v482, 0.0
    %v485 = vld [vmem:[#allocation8 + $0x100] sm:$0xff]
    %v486 = vld [vmem:[#allocation8 + $0x108] sm:$0xff]
    %v487 = vld [vmem:[#allocation8 + $0x110] sm:$0xff]
    %v488 = vld [vmem:[#allocation8 + $0x118] sm:$0xff]
    %v489 = vld [vmem:[#allocation8 + $0x120] sm:$0xff]
    %v490 = vld [vmem:[#allocation8 + $0x128] sm:$0xff]
    %v491 = vld [vmem:[#allocation8 + $0x130] sm:$0xff]
    %v492 = vld [vmem:[#allocation8 + $0x138] sm:$0xff]
    %v493 = vld [vmem:[#allocation8 + $0x140] sm:$0xff]
    %v494 = vld [vmem:[#allocation8 + $0x148] sm:$0xff]
    %v495 = vld [vmem:[#allocation8 + $0x150] sm:$0xff]
    %v496 = vld [vmem:[#allocation8 + $0x158] sm:$0xff]
    %v497 = vld [vmem:[#allocation8 + $0x160] sm:$0xff]
    %v498 = vld [vmem:[#allocation8 + $0x168] sm:$0xff]
    %v499 = vld [vmem:[#allocation8 + $0x170] sm:$0xff]
    %v500 = vld [vmem:[#allocation8 + $0x178] sm:$0xff]
    %v501 = vld [vmem:[#allocation8 + $0x210] sm:$0x1]
    %v502 = vperm.slane %v501, 0
    %503 = vmatpush.msra.mxu0 %v500
    %504 = vmatpush.msra.mxu0 %v499
    %505 = vmatpush.msra.mxu0 %v498
    %506 = vmatpush.msra.mxu0 %v497
    %507 = vmatpush.msra.mxu0 %v496
    %508 = vmatpush.msra.mxu0 %v495
    %509 = vmatpush.msra.mxu0 %v494
    %510 = vmatpush.msra.mxu0 %v493
    %511 = vmatpush.msra.mxu0 %v492
    %512 = vmatpush.msra.mxu0 %v491
    %513 = vmatpush.msra.mxu0 %v490
    %514 = vmatpush.msra.mxu0 %v489
    %515 = vmatpush.msra.mxu0 %v488
    %516 = vmatpush.msra.mxu0 %v487
    %517 = vmatpush.msra.mxu0 %v486
    %518 = vmatpush.msra.mxu0 %v485
    %519 = vmatmul.f32.gmra.mxu0 %v484
    %v520 = vpop.f32.mrf.mxu0
    %v521 = vadd.f32 %v502, %v520
    %522 = vdwg.mxu0
    %v523 = vmax.f32 %v521, 0.0
    %v524 = vld [vmem:[#allocation8 + $0x180] sm:$0xff]
    %v525 = vld [vmem:[#allocation8 + $0x188] sm:$0xff]
    %v526 = vld [vmem:[#allocation8 + $0x190] sm:$0xff]
    %v527 = vld [vmem:[#allocation8 + $0x198] sm:$0xff]
    %v528 = vld [vmem:[#allocation8 + $0x1a0] sm:$0xff]
    %v529 = vld [vmem:[#allocation8 + $0x1a8] sm:$0xff]
    %v530 = vld [vmem:[#allocation8 + $0x1b0] sm:$0xff]
    %v531 = vld [vmem:[#allocation8 + $0x1b8] sm:$0xff]
    %v532 = vld [vmem:[#allocation8 + $0x1c0] sm:$0xff]
    %v533 = vld [vmem:[#allocation8 + $0x1c8] sm:$0xff]
    %v534 = vld [vmem:[#allocation8 + $0x1d0] sm:$0xff]
    %v535 = vld [vmem:[#allocation8 + $0x1d8] sm:$0xff]
    %v536 = vld [vmem:[#allocation8 + $0x1e0] sm:$0xff]
    %v537 = vld [vmem:[#allocation8 + $0x1e8] sm:$0xff]
    %v538 = vld [vmem:[#allocation8 + $0x1f0] sm:$0xff]
    %v539 = vld [vmem:[#allocation8 + $0x1f8] sm:$0xff]
    %v540 = vld [vmem:[#allocation8 + $0x218] sm:$0x1]
    %v541 = vperm.slane %v540, 0
    %542 = vmatpush.msra.mxu0 %v539
    %543 = vmatpush.msra.mxu0 %v538
    %544 = vmatpush.msra.mxu0 %v537
    %545 = vmatpush.msra.mxu0 %v536
    %546 = vmatpush.msra.mxu0 %v535
    %547 = vmatpush.msra.mxu0 %v534
    %548 = vmatpush.msra.mxu0 %v533
    %549 = vmatpush.msra.mxu0 %v532
    %550 = vmatpush.msra.mxu0 %v531
    %551 = vmatpush.msra.mxu0 %v530
    %552 = vmatpush.msra.mxu0 %v529
    %553 = vmatpush.msra.mxu0 %v528
    %554 = vmatpush.msra.mxu0 %v527
    %555 = vmatpush.msra.mxu0 %v526
    %556 = vmatpush.msra.mxu0 %v525
    %557 = vmatpush.msra.mxu0 %v524
    %558 = vmatmul.f32.gmra.mxu0 %v523
    %v559 = vpop.f32.mrf.mxu0
    %v560 = vadd.f32 %v541, %v559
    %561 = vdwg.mxu0
    %vm562 = vcmp.lt.s32.totalorder %v78, 4
    %v563 = vsel %vm562, %v560, -1e+30
    %564 = vmax.xlane.f32.xlu0 %v563
    %v565 = vpop.xlane.xlu0 %564
    %vm566 = vcmp.eq.f32.partialorder %v563, %v565
    %v567 = vsel %vm566, %v78, 128
    %v568 = vand.u32 %v567, 65535
    %v569 = vshra.s32 %v567, 16
    %v570 = vcvt.s32.f32 %v568
    %v571 = vcvt.s32.f32 %v569
    %572 = vmin.xlane.f32.xlu0 %v571
    %v573 = vpop.xlane.xlu0 %572
    %vm574 = vcmp.eq.f32.partialorder %v571, %v573
    %v575 = vsel %vm574, %v570, inf
    %576 = vmin.xlane.f32.xlu0 %v575
    %v577 = vpop.xlane.xlu0 %576
    %v578 = vcvt.f32.s32 %v577
    %v579 = vcvt.f32.s32 %v573
    %v580 = vshll.u32 %v579, 16
    %v581 = vadd.s32 %v580, %v578
    %v582 = vsub.f32 %v563, %v565
    %v583 = vmul.f32 %v582, 1.442695
    %v584 = vpow.pop %v583
    %585 = vadd.xlane.f32.xlu0 %v584
    %v586 = vpop.xlane.xlu0 %585
    %v587 = vlog2.pop %v586
    %v588 = vmul.f32 %v587, 0.6931472
    %v589 = vadd.f32 %v588, %v565
    %s590 = sld [smem:[#allocation7]]
    %v591 = vstv %s590
    %v592 = vsel %vm168, %v591, 0
    %s593 = sld [smem:[#allocation7 + $0x1]]
    %v594 = vstv %s593
    %v595 = vsel %vm332, %v594, %v592
    %vm596 = vcmp.eq.s32.totalorder %v78, %v595
    %v597 = vsel %vm596, %v560, 0.0
    %598 = vadd.xlane.f32.xlu0 %v597
    %v599 = vpop.xlane.xlu0 %598
    %v600 = vsub.f32 %v589, %v599
    %vm601 = vcmp.lt.s32.totalorder %v76, 2
    %v602 = vsel %vm601, %v600, 0.0
    %vm603 = vcmask 7168
    %v604 = vsel %vm603, %v602, 0.0
    %605 = vadd.xlane.f32.xlu0 %v604
    %v606 = vpop.xlane.xlu0 %605
    %v607 = vrot.slane %v606, 4
    %v608 = vadd.f32 %v606, %v607
    %v609 = vrot.slane %v608, 2
    %v610 = vadd.f32 %v608, %v609
    %v611 = vrot.slane %v610, 1
    %v612 = vadd.f32 %v610, %v611
    %s613 = vtos %v612
    %s614 = smul.f32 %s613, 0.5
    %vm615 = vcmp.eq.s32.totalorder %v78, 0
    %v616 = vcvt.s32.f32 %v581
    %v617 = vstv %s614
    %v618 = vsel %vm615, %v616, %v617
    %619 = vst [vmem:[%s6] sm:$0xff] %v618
    // Predicated region
    $region42: #{model_forward.1} parent=1 // pred_check
      _
    $region43: #{model_forward.1} parent=1 // pred_check_branch
      %621 = sbr.rel (0) target = $region45
    $region44: #{model_forward.1} parent=1 // pred_region
      _
    $region45: #{model_forward.1} parent=1 // pred_fallthru
      _
    // Predicated region
    $region46: #{model_forward.1} parent=1 // pred_check
      _
    $region47: #{model_forward.1} parent=1 // pred_check_branch
      %623 = sbr.rel (0) target = $region49
    $region48: #{model_forward.1} parent=1 // pred_region
      _
    $region49: #{model_forward.1} parent=1 // pred_fallthru
      _
    %624 = vsyncpa [#allocation3], 1
    %625 = vsyncpa [#allocation4], 1
    %626 = vsyncpa [#allocation6], 1

</llo_original>
